<compile_context>
chip_gen: v5e
topology: v5e:2x2
jax: 0.10.0
libtpu: 0.0.40
codegen_flags: <defaults>
</compile_context>

<pallas_src>
import functools

import jax
import jax.numpy as jnp
from jax import lax
from jax.experimental import pallas as pl
from jax.experimental.pallas import tpu as pltpu

_EPS = 1e-12  # F.normalize eps: x / max(||x||, eps)


def _round_up(a: int, b: int) -> int:
    return ((a + b - 1) // b) * b


def _project_prototypes_kernel(proto_ref, w_ref, p_ref, *, cosine: bool):
    """One-shot: p = prototypes @ W  (optionally L2-normalized along Dp)."""
    p = jnp.dot(proto_ref[...], w_ref[...], preferred_element_type=jnp.float32)  # [K, Dp]
    if cosine:
        sumsq = jnp.sum(p * p, axis=-1, keepdims=True)
        p = p * lax.rsqrt(jnp.maximum(sumsq, _EPS * _EPS))  # == p / max(||p||, eps)
    p_ref[...] = p.astype(p_ref.dtype)


def _similarity_kernel(x_ref, p_ref, sim_ref, *, cosine: bool):
    """Per row-tile: sim = normalize(x) @ p^T, contracting the feature dim."""
    x = x_ref[...].astype(jnp.float32)  # [T, Dp] — normalization math in f32
    if cosine:
        sumsq = jnp.sum(x * x, axis=-1, keepdims=True)
        x = x * lax.rsqrt(jnp.maximum(sumsq, _EPS * _EPS))  # == x / max(||x||, eps)

    # Contract last dim of both operands ('nd,kd->nk') — no explicit transpose,
    # MXU consumes the [K, Dp] operand directly. Operand dtype follows p_ref
    # (f32 or bf16); accumulation stays f32.
    sim = lax.dot_general(
        x.astype(p_ref.dtype),
        p_ref[...],
        dimension_numbers=(((1,), (1,)), ((), ())),
        preferred_element_type=jnp.float32,
    )  # [T, K]
    sim_ref[...] = sim.astype(sim_ref.dtype)


def prototype_block(
    x,
    prototypes,
    w_proj_t,
    similarity: str = "cosine",
    *,
    tile_rows: int = 512,
    matmul_dtype=None,
):
    """PrototypeBlock forward.

    x: [B, N, Dp], prototypes: [K, Din], w_proj_t: [Din, Dp] (transposed
    nn.Linear weight, so prototypes @ w_proj_t == projector(prototypes)).

    Returns (sim [B, N, K], sim_mean [B, N]), matching the PyTorch module.
    `matmul_dtype=jnp.bfloat16` feeds bf16 operands to the MXU (f32 accum).
    """
    B, N, Dp = x.shape
    K, Din = prototypes.shape
    assert w_proj_t.shape == (Din, Dp)
    cosine = similarity == "cosine"

    # --- Step 1: project (and normalize) the prototypes ONCE. ---------------
    p = pl.pallas_call(
        functools.partial(_project_prototypes_kernel, cosine=cosine),
        out_shape=jax.ShapeDtypeStruct((K, Dp), jnp.float32),
    )(prototypes, w_proj_t)
    if matmul_dtype is not None:
        p = p.astype(matmul_dtype)  # cast once in the wrapper, not per tile

    # --- Step 2: similarity over B*N rows, tiled in fat row blocks. ---------
    rows = B * N
    x2 = x.reshape(rows, Dp)

    tile = min(tile_rows, _round_up(rows, 8))
    tile = _round_up(tile, 8)
    rows_pad = _round_up(rows, tile)
    if rows_pad != rows:
        # Padded rows have zero norm -> sim rows of exact zeros; sliced below.
        x2 = jnp.pad(x2, ((0, rows_pad - rows), (0, 0)))
    grid = (rows_pad // tile,)

    sim2 = pl.pallas_call(
        functools.partial(_similarity_kernel, cosine=cosine),
        out_shape=jax.ShapeDtypeStruct((rows_pad, K), jnp.float32),
        grid_spec=pltpu.PrefetchScalarGridSpec(
            num_scalar_prefetch=0,
            grid=grid,
            in_specs=[
                pl.BlockSpec((tile, Dp), lambda r: (r, 0)),  # row tile of x
                pl.BlockSpec((K, Dp), lambda r: (0, 0)),     # constant p (no re-DMA)
            ],
            out_specs=pl.BlockSpec((tile, K), lambda r: (r, 0)),
        ),
        compiler_params=pltpu.CompilerParams(
            dimension_semantics=("parallel",),  # megacore splits row tiles (v7x)
        ),
    )(x2, p)

    sim = sim2[:rows].reshape(B, N, K)
    sim_mean = jnp.mean(sim, axis=-1)  # cheap; XLA fuses it with the slice
    return sim, sim_mean


def _reference(x, prototypes, w_proj_t, similarity="cosine"):
    eps = 1e-12
    p = prototypes @ w_proj_t
    if similarity == "cosine":
        x = x / jnp.maximum(jnp.linalg.norm(x, axis=-1, keepdims=True), eps)
        p = p / jnp.maximum(jnp.linalg.norm(p, axis=-1, keepdims=True), eps)
    sim = jnp.einsum("bnd,kd->bnk", x, p)
    return sim, sim.mean(axis=-1)


if __name__ == "__main__":
    # Small shapes consistent with the module's forward.
    B, N = 2, 8          # bags, instances per bag
    K, Din = 16, 64      # number of prototypes, prototype feature dim
    Dp = 32              # proj_dim (== last dim of x after HPMIL projector)

    key = jax.random.PRNGKey(0)
    k_x, k_p, k_w = jax.random.split(key, 3)

    x = jax.random.normal(k_x, (B, N, Dp), dtype=jnp.float32)
    prototypes = jax.random.normal(k_p, (K, Din), dtype=jnp.float32)
    # nn.Linear(Din, Dp, bias=False).weight has shape [Dp, Din]; pass its
    # transpose [Din, Dp] so prototypes @ w_proj_t == projector(prototypes).
    w_proj = jax.random.normal(k_w, (Dp, Din), dtype=jnp.float32) * (1.0 / jnp.sqrt(Din))
    w_proj_t = w_proj.T

    sim_ref, sim_mean_ref = _reference(x, prototypes, w_proj_t, similarity="cosine")

    # f32 MXU path (exact).
    sim, sim_mean = prototype_block(x, prototypes, w_proj_t, similarity="cosine")
    jax.block_until_ready((sim, sim_mean))
    assert sim.shape == (B, N, K) and sim_mean.shape == (B, N)
    assert jnp.allclose(sim, sim_ref, atol=1e-5, rtol=1e-5)
    assert jnp.allclose(sim_mean, sim_mean_ref, atol=1e-5, rtol=1e-5)

    # bf16 MXU operands (v6e/v7x fast path): f32 normalization + f32 accumulation.
    sim_bf, sim_mean_bf = prototype_block(
        x, prototypes, w_proj_t, similarity="cosine", matmul_dtype=jnp.bfloat16
    )
    jax.block_until_ready((sim_bf, sim_mean_bf))
    assert jnp.allclose(sim_bf, sim_ref, atol=3e-2, rtol=3e-2)
    assert jnp.allclose(sim_mean_bf, sim_mean_ref, atol=3e-2, rtol=3e-2)

    print("KERNEL_OK")
</pallas_src>

<mosaic_0001>
module attributes {stable_mosaic.version = 11 : i64} {
  func.func @_project_prototypes_kernel(%arg0: memref<16x64xf32, #tpu.memory_space<vmem>>, %arg1: memref<64x32xf32, #tpu.memory_space<vmem>>, %arg2: memref<16x32xf32, #tpu.memory_space<vmem>>) attributes {dimension_semantics = [], scalar_prefetch = 0 : i64, scratch_operands = 0 : i64, tpu.core_type = #tpu.core_type<tc>} {
    %c0 = arith.constant 0 : index
    %c0_0 = arith.constant 0 : index
    %0 = vector.load %arg0[%c0, %c0_0] : memref<16x64xf32, #tpu.memory_space<vmem>>, vector<16x64xf32>
    %c0_1 = arith.constant 0 : index
    %c0_2 = arith.constant 0 : index
    %1 = vector.load %arg1[%c0_1, %c0_2] : memref<64x32xf32, #tpu.memory_space<vmem>>, vector<64x32xf32>
    %cst = arith.constant dense<0.000000e+00> : vector<16x32xf32>
    %2 = tpu.matmul %0, %1, %cst {dimension_numbers = #tpu.dot_dimension_numbers<[1], [0], [0], [1], [0, 0, 1, 1], [], []>} : vector<16x64xf32>, vector<64x32xf32>, vector<16x32xf32> -> vector<16x32xf32>
    %3 = arith.mulf %2, %2 : vector<16x32xf32>
    %cst_3 = arith.constant dense<0.000000e+00> : vector<16xf32>
    %4 = vector.multi_reduction <add>, %3, %cst_3 [1] : vector<16x32xf32> to vector<16xf32>
    %5 = vector.shape_cast %4 : vector<16xf32> to vector<16x1xf32>
    %cst_4 = arith.constant 1.000000e-24 : f32
    %6 = vector.broadcast %cst_4 : f32 to vector<16x1xf32>
    %7 = arith.maximumf %5, %6 : vector<16x1xf32>
    %8 = math.rsqrt %7 : vector<16x1xf32>
    %9 = vector.broadcast %8 : vector<16x1xf32> to vector<16x32xf32>
    %10 = arith.mulf %2, %9 : vector<16x32xf32>
    %c0_5 = arith.constant 0 : index
    %c0_6 = arith.constant 0 : index
    %11 = vector.load %arg2[%c0_5, %c0_6] : memref<16x32xf32, #tpu.memory_space<vmem>>, vector<16x32xf32>
    tpu.vector_store %arg2[%c0_5, %c0_6], %10 {strides = array<i32>} : memref<16x32xf32, #tpu.memory_space<vmem>>, vector<16x32xf32>,
    return
  }
}

</mosaic_0001>

<llo_original>
// kernel: tpu_custom_call.1
$region0: #{tpu_custom_call.1}
  #allocation0 [shape = 'u32[]', space=smem, size = 0x4, offset = 0x4, fixed_abs, tag = 'smem constant byte address 0x4 - core index']
  #allocation1 [shape = 'u32[72,128]{1,0:T(1,128)}', space=vmem, size = 0x9000, scoped, tag = 'internal scratch']
  %s0 = inlined_call_operand.vmem [shape: f32[16,64], index: 0, kind: input, shape index: {}]
  %s1 = inlined_call_operand.vmem [shape: f32[64,32], index: 1, kind: input, shape index: {}]
  %s2 = inlined_call_operand.hbm [shape: f32[16,32], index: 2, kind: output, shape index: {}]
  %s3 = sld [smem:[#allocation0]]
  $region18: #{tpu_custom_call.1} parent=0
    _
  %s5 = ssub.s32 1, %s3
  %s6 = scalar_select 0, %s5, %s3
  $region1: #{tpu_custom_call.1} parent=0
    #allocation2 [shape = 'u8[8192]{0}', space=vmem, size = 0x2000, scoped, tag = 'output window, operand 0, single buffered']
    #allocation3 [shape = 's32[1]{0}', space=sflag, size = 0x4, scoped, tag = 'scoped memory for tpu_custom_call.1']
    %7 = vsyncpa [#allocation3], 0
    // Predicated region
    $region2: #{tpu_custom_call.1} parent=1 // pred_check
      _
    $region3: #{tpu_custom_call.1} parent=1 // pred_check_branch
      %9 = sbr.rel (0) target = $region5
    $region4: #{tpu_custom_call.1} parent=1 // pred_region
      _
    $region5: #{tpu_custom_call.1} parent=1 // pred_fallthru
      _
    // Predicated region
    $region6: #{tpu_custom_call.1} parent=1 // pred_check
      _
    $region7: #{tpu_custom_call.1} parent=1 // pred_check_branch
      %11 = sbr.rel (0) target = $region9
    $region8: #{tpu_custom_call.1} parent=1 // pred_region
      _
    $region9: #{tpu_custom_call.1} parent=1 // pred_fallthru
      _
    %v12 = vld [vmem:[%s0] sm:$0xff]
    %v13 = vld [vmem:[%s0 + $0x8] sm:$0xff]
    %v14 = vld [vmem:[%s1] sm:$0xff]
    %v15 = vld [vmem:[%s1 + $0x8] sm:$0xff]
    %v16 = vld [vmem:[%s1 + $0x10] sm:$0xff]
    %v17 = vld [vmem:[%s1 + $0x18] sm:$0xff]
    %v18 = vld [vmem:[%s1 + $0x20] sm:$0xff]
    %v19 = vld [vmem:[%s1 + $0x28] sm:$0xff]
    %v20 = vld [vmem:[%s1 + $0x30] sm:$0xff]
    %v21 = vld [vmem:[%s1 + $0x38] sm:$0xff]
    %vm22 = vcmask 523264
    %v24 = vsel %vm22, %v12, 0
    %v27 = vsel %vm22, %v13, 0
    %29 = vmatpush.msra.mxu0 0.0
    %30 = vmatpush.msra.mxu0 0.0
    %31 = vmatpush.msra.mxu0 0.0
    %32 = vmatpush.msra.mxu0 0.0
    %33 = vmatpush.msra.mxu0 0.0
    %34 = vmatpush.msra.mxu0 0.0
    %35 = vmatpush.msra.mxu0 0.0
    %36 = vmatpush.msra.mxu0 0.0
    %37 = vmatpush.msra.mxu0 %v21
    %38 = vmatpush.msra.mxu0 %v20
    %39 = vmatpush.msra.mxu0 %v19
    %40 = vmatpush.msra.mxu0 %v18
    %41 = vmatpush.msra.mxu0 %v17
    %42 = vmatpush.msra.mxu0 %v16
    %43 = vmatpush.msra.mxu0 %v15
    %44 = vmatpush.msra.mxu0 %v14
    %45 = vmatmul.f32.gmra.mxu0 %v24
    %v46 = vpop.f32.mrf.mxu0
    %v47 = vadd.f32 0.0, %v46
    %48 = vmatmul.f32.gmra.mxu0 %v27
    %v49 = vpop.f32.mrf.mxu0
    %v50 = vadd.f32 0.0, %v49
    %51 = vdwg.mxu0
    %v52 = vmul.f32 %v47, %v47
    %v53 = vmul.f32 %v50, %v50
    %vm54 = vcmask 261120
    %v55 = vsel %vm54, %v52, 0.0
    %56 = vadd.xlane.f32.xlu0 %v55
    %v57 = vpop.xlane.xlu0 %56
    %v58 = vsel %vm54, %v53, 0.0
    %59 = vadd.xlane.f32.xlu0 %v58
    %v60 = vpop.xlane.xlu0 %59
    %v61 = vmax.f32 %v57, 1e-24
    %v62 = vmax.f32 %v60, 1e-24
    %v63 = vrsqrt.pop %v61
    %v64 = vmul.f32 %v63, %v61
    %v65 = vmul.f32 %v64, %v63
    %v66 = vmul.f32 0.5, %v65
    %v67 = vsub.f32 1.5, %v66
    %v68 = vmul.f32 %v63, %v67
    %vm69 = vweird.f32 %v61
    %vm70 = vweird.f32 %v63
    %vm71 = vmor %vm69, %vm70
    %v72 = vsel %vm71, %v63, %v68
    %v73 = vrsqrt.pop %v62
    %v74 = vmul.f32 %v73, %v62
    %v75 = vmul.f32 %v74, %v73
    %v76 = vmul.f32 0.5, %v75
    %v77 = vsub.f32 1.5, %v76
    %v78 = vmul.f32 %v73, %v77
    %vm79 = vweird.f32 %v62
    %vm80 = vweird.f32 %v73
    %vm81 = vmor %vm79, %vm80
    %v82 = vsel %vm81, %v73, %v78
    %v83 = vmul.f32 %v47, %v72
    %v84 = vmul.f32 %v50, %v82
    %85 = vst.msk [vmem:[#allocation2] sm:$0xff] %vm54, %v83
    %86 = vst.msk [vmem:[#allocation2 + $0x8] sm:$0xff] %vm54, %v84
    // Predicated region
    $region10: #{tpu_custom_call.1} parent=1 // pred_check
      _
    $region11: #{tpu_custom_call.1} parent=1 // pred_check_branch
      %88 = sbr.rel (0) target = $region13
    $region12: #{tpu_custom_call.1} parent=1 // pred_region
      %90 = vsyncadd [#allocation3], 0
      %s91 = sshll.u32 [#allocation2], 4
      %s92 = int_to_ptr.vmem [resolvable:$true] %s91
      %s93 = sshll.u32 %s2, 4
      %s94 = int_to_ptr.hbm [resolvable:$true] %s93
      %99 = dma.vmem_to_hbm [thread:$0]  %s92, 256, %s94, [#allocation3], 128, 128, 8
    $region13: #{tpu_custom_call.1} parent=1 // pred_fallthru
      _
    // Predicated region
    $region14: #{tpu_custom_call.1} parent=1 // pred_check
      _
    $region15: #{tpu_custom_call.1} parent=1 // pred_check_branch
      %101 = sbr.rel (0) target = $region17
    $region16: #{tpu_custom_call.1} parent=1 // pred_region
      %103 = dma.done [#allocation3], 256
    $region17: #{tpu_custom_call.1} parent=1 // pred_fallthru
      _
    %104 = vsyncpa [#allocation3], 1

</llo_original>
